<compile_context>
chip_gen: v7x
topology: tpu7x:2x2x1
jax: 0.10.0
libtpu: 0.0.40
codegen_flags: <defaults>
</compile_context>

<pallas_src>
import functools

import jax
import jax.numpy as jnp
from jax import lax
from jax.experimental import pallas as pl
from jax.experimental.pallas import tpu as pltpu


# --------------------------- stage 1: column sums ---------------------------

def _partial_colsum_kernel(x_ref, o_ref, acc_ref, *,
                           n_packed: int, tile_n: int, chunk_rows: int,
                           acc_rows: int, tiles_per_core: int,
                           needs_mask: bool):
    core = pl.program_id(0)          # "parallel" axis (TensorCore split on v7x)
    t = pl.program_id(1)             # "arbitrary" reduction axis over tiles
    cp = x_ref.shape[1]
    nchunks = tile_n // chunk_rows

    @pl.when(t == 0)
    def _():
        acc_ref[...] = jnp.zeros_like(acc_ref)

    def chunk_sum(j, base_row):
        # Static slice: j and chunk_rows are Python ints.
        xc = x_ref[pl.ds(j * chunk_rows, chunk_rows), :].astype(jnp.float32)
        if base_row is not None:     # masked (ragged / out-of-range) path only
            row = lax.broadcasted_iota(jnp.int32, (chunk_rows, 1), 0)
            xc = jnp.where(base_row + (j * chunk_rows) + row < n_packed, xc, 0.0)
        if chunk_rows == acc_rows:
            return xc
        return jnp.sum(xc.reshape(chunk_rows // acc_rows, acc_rows, cp), axis=0)

    def sweep(masked):
        base_row = (core * tiles_per_core + t) * tile_n if masked else None
        acc = acc_ref[...]
        for j in range(nchunks):     # static unroll (nchunks is small, <= ~32)
            acc = acc + chunk_sum(j, base_row)
        acc_ref[...] = acc

    if needs_mask:
        g = core * tiles_per_core + t
        tile_is_full = (g + 1) * tile_n <= n_packed

        @pl.when(tile_is_full)
        def _():
            sweep(masked=False)      # steady state: no iota/compare/select

        @pl.when(jnp.logical_not(tile_is_full))
        def _():
            sweep(masked=True)       # at most one tile per core
    else:
        sweep(masked=False)

    @pl.when(t == tiles_per_core - 1)
    def _():
        o_ref[0] = acc_ref[...]      # per-core (acc_rows, cp) partial sums


# --------------------- stage 2: fold + mean + entropy -----------------------

def _entropy_finalize_kernel(ps_ref, o_ref, *, n_total: int, k: int, c: int,
                             after_softmax: bool):
    ps = ps_ref[...]                                       # (cores, acc_rows, cp)
    col = jnp.sum(jnp.sum(ps, axis=0), axis=0, keepdims=True)   # (1, cp)

    if k > 1:
        # Fold the k lane-interleaved copies back to (1, c):
        # fold[j, q] = 1 iff j % c == q  (tiny one-shot MXU matmul).
        kc = k * c
        rj = lax.broadcasted_iota(jnp.int32, (kc, c), 0)
        cq = lax.broadcasted_iota(jnp.int32, (kc, c), 1)
        fold = (rj % c == cq).astype(jnp.float32)
        col = jnp.dot(col, fold, preferred_element_type=jnp.float32)  # (1, c)

    m = col * (1.0 / n_total)                              # batch mean, (1, c)

    if not after_softmax:
        z = m - jnp.max(m, axis=1, keepdims=True)
        log_sm = z - jnp.log(jnp.sum(jnp.exp(z), axis=1, keepdims=True))
        # loss = -entropy = sum(softmax * log_softmax); single row.
        loss = jnp.sum(jnp.exp(log_sm) * log_sm)
    else:
        eps = jnp.finfo(jnp.float32).tiny
        loss = jnp.sum(m * jnp.log(m + eps))

    o_ref[0, 0] = loss


# ------------------------------- wrapper ------------------------------------

def _choose_pack_factor(n: int, c: int, max_packed_width: int = 1024) -> int:
    """Pick k so logits.reshape(n//k, k*c) is as lane-dense as possible."""
    if c >= 128 or n <= 1:
        return 1
    best_k, best_util = 1, 0.0
    limit = min(n, max(1, max_packed_width // c))
    for k in range(1, limit + 1):
        if n % k:
            continue
        cp = k * c
        util = cp / float(((cp + 127) // 128) * 128)
        if util > best_util + 1e-9 or (abs(util - best_util) <= 1e-9 and k > best_k):
            best_k, best_util = k, util
    return best_k


def diversity_loss(logits: jax.Array, after_softmax: bool = False, *,
                   max_tile_rows=None, num_cores: int = 2) -> jax.Array:
    """Pallas TPU implementation of pytorch_adapt DiversityLoss.forward."""
    assert logits.ndim == 2, "expected (batch, num_classes) logits"
    n, c = logits.shape
    assert n >= 1 and c >= 1

    # ---- lane packing for small class counts (any C < 128) -----------------
    k = _choose_pack_factor(n, c)
    x = logits.reshape(n // k, k * c) if k > 1 else logits
    n_packed, cp = x.shape

    # ---- tile sizing: ~4 MiB of input per DMA block -------------------------
    itemsize = jnp.dtype(logits.dtype).itemsize
    row_bytes = max(cp * itemsize, 1)
    tile_n = (4 * 1024 * 1024) // row_bytes
    if max_tile_rows is not None:
        tile_n = min(tile_n, int(max_tile_rows))
    tile_n = min(tile_n, ((n_packed + 7) // 8) * 8)
    tile_n = max(8, tile_n)

    # Accumulator depth: several independent vreg add chains when possible.
    acc_rows = 8
    for r in (32, 16, 8):
        if tile_n >= r:
            acc_rows = r
            tile_n = (tile_n // r) * r
            break

    # In-kernel chunking: keep the f32 working set per step at ~512 KiB.
    max_chunk = ((131072 // max(cp, 1)) // acc_rows) * acc_rows
    max_chunk = max(acc_rows, max_chunk)
    chunk_rows = min(tile_n, max_chunk)
    tile_n = max(chunk_rows, (tile_n // chunk_rows) * chunk_rows)

    num_data_tiles = pl.cdiv(n_packed, tile_n)
    cores = max(1, min(int(num_cores), num_data_tiles))
    tiles_per_core = pl.cdiv(num_data_tiles, cores)
    has_oob_tiles = cores * tiles_per_core != num_data_tiles
    needs_mask = has_oob_tiles or (n_packed % tile_n != 0)

    if has_oob_tiles:
        # Clamp the DMA index for the (at most one) fully out-of-range tile;
        # its contribution is zeroed in-kernel by the row mask.
        def in_index_map(core, t):
            g = core * tiles_per_core + t
            return (jnp.minimum(g, num_data_tiles - 1), 0)
    else:
        def in_index_map(core, t):
            return (core * tiles_per_core + t, 0)

    stage1 = functools.partial(
        _partial_colsum_kernel,
        n_packed=n_packed, tile_n=tile_n, chunk_rows=chunk_rows,
        acc_rows=acc_rows, tiles_per_core=tiles_per_core,
        needs_mask=needs_mask)

    cost = pl.CostEstimate(
        flops=int(n * c),
        transcendentals=0,
        bytes_accessed=int(n * c * itemsize + cores * acc_rows * cp * 4))

    partial_sums = pl.pallas_call(
        stage1,
        out_shape=jax.ShapeDtypeStruct((cores, acc_rows, cp), jnp.float32),
        grid=(cores, tiles_per_core),
        in_specs=[pl.BlockSpec((tile_n, cp), in_index_map)],
        out_specs=pl.BlockSpec((1, acc_rows, cp), lambda core, t: (core, 0, 0)),
        scratch_shapes=[pltpu.VMEM((acc_rows, cp), jnp.float32)],
        compiler_params=pltpu.CompilerParams(
            dimension_semantics=("parallel", "arbitrary"),
            vmem_limit_bytes=32 * 1024 * 1024,
        ),
        cost_estimate=cost,
    )(x)

    stage2 = functools.partial(
        _entropy_finalize_kernel,
        n_total=n, k=k, c=c, after_softmax=after_softmax)

    out = pl.pallas_call(
        stage2,
        out_shape=jax.ShapeDtypeStruct((1, 1), jnp.float32),
        grid=(1,),
        in_specs=[pl.BlockSpec((cores, acc_rows, cp), lambda i: (0, 0, 0))],
        out_specs=pl.BlockSpec(memory_space=pltpu.MemorySpace.SMEM),
        compiler_params=pltpu.CompilerParams(
            dimension_semantics=("arbitrary",)),
    )(partial_sums)

    return out[0, 0]


# ------------------------------ reference -----------------------------------

def _reference(logits, after_softmax=False):
    m = jnp.mean(logits.astype(jnp.float32), axis=0, keepdims=True)
    if not after_softmax:
        log_sm = jax.nn.log_softmax(m, axis=1)
        sm = jax.nn.softmax(m, axis=1)
        ent = -jnp.sum(sm * log_sm, axis=1)
    else:
        eps = jnp.finfo(jnp.float32).tiny
        ent = -jnp.sum(m * jnp.log(m + eps), axis=1)
    return -jnp.mean(ent)


if __name__ == "__main__":
    key = jax.random.PRNGKey(0)
    k1, k2, k3, k4 = jax.random.split(key, 4)

    # 1) default path (after_softmax=False), small C -> lane packing (8,16)->(1,128).
    logits = jax.random.normal(k1, (8, 16), dtype=jnp.float32) * 3.0
    out = jax.block_until_ready(diversity_loss(logits, after_softmax=False))
    ref = _reference(logits, after_softmax=False)
    assert jnp.allclose(out, ref, atol=2e-5, rtol=2e-5), (out, ref)

    # 2) after_softmax=True path.
    probs = jax.nn.softmax(logits, axis=1)
    out2 = jax.block_until_ready(diversity_loss(probs, after_softmax=True))
    ref2 = _reference(probs, after_softmax=True)
    assert jnp.allclose(out2, ref2, atol=2e-5, rtol=2e-5), (out2, ref2)

    # 3) bf16 input, non-divisor C=10 -> generalized packing (64,10)->(1,640).
    logits_bf16 = (jax.random.normal(k2, (64, 10), dtype=jnp.float32) * 2.0
                   ).astype(jnp.bfloat16)
    out3 = jax.block_until_ready(diversity_loss(logits_bf16, after_softmax=False))
    ref3 = _reference(logits_bf16, after_softmax=False)
    assert jnp.allclose(out3, ref3, atol=2e-5, rtol=2e-5), (out3, ref3)

    # 4) forced small tiles: multi-tile grid, 2-way core split, ragged mask,
    #    clamped out-of-range tile.
    logits4 = jax.random.normal(k3, (200, 160), dtype=jnp.float32)
    out4 = jax.block_until_ready(
        diversity_loss(logits4, after_softmax=False, max_tile_rows=16))
    ref4 = _reference(logits4, after_softmax=False)
    assert jnp.allclose(out4, ref4, atol=2e-5, rtol=2e-5), (out4, ref4)

    # 5) multi-chunk inner loop + 32-row accumulator.
    logits5 = jax.random.normal(k4, (2048, 128), dtype=jnp.float32)
    out5 = jax.block_until_ready(diversity_loss(logits5, after_softmax=False))
    ref5 = _reference(logits5, after_softmax=False)
    assert jnp.allclose(out5, ref5, atol=2e-5, rtol=2e-5), (out5, ref5)

    print("KERNEL_OK")
</pallas_src>

<mosaic_0001>
module attributes {stable_mosaic.version = 11 : i64} {
  func.func @_partial_colsum_kernel(%arg0: i32, %arg1: i32, %arg2: memref<8x128xf32, #tpu.memory_space<vmem>>, %arg3: memref<1x8x128xf32, #tpu.memory_space<vmem>>, %arg4: memref<8x128xf32, #tpu.memory_space<vmem>>) attributes {dimension_semantics = [#tpu.dimension_semantics<parallel>, #tpu.dimension_semantics<arbitrary>], iteration_bounds = array<i64: 1, 1>, scalar_prefetch = 0 : i64, scratch_operands = 1 : i64, tpu.core_type = #tpu.core_type<tc>, window_params = [{transform_indices = @transform_0, window_bounds = array<i64: 8, 128>}, {transform_indices = @transform_1, window_bounds = array<i64: 1, 8, 128>}]} {
    %c0_i32 = arith.constant 0 : i32
    %0 = arith.cmpi eq, %arg1, %c0_i32 : i32
    %1 = arith.extui %0 : i1 to i32
    %c0_i32_0 = arith.constant 0 : i32
    %2 = arith.cmpi ne, %1, %c0_i32_0 : i32
    scf.if %2 {
      %cst = arith.constant 0.000000e+00 : f32
      %16 = vector.broadcast %cst : f32 to vector<8x128xf32>
      %c0 = arith.constant 0 : index
      %c0_7 = arith.constant 0 : index
      %17 = vector.load %arg4[%c0, %c0_7] : memref<8x128xf32, #tpu.memory_space<vmem>>, vector<8x128xf32>
      tpu.vector_store %arg4[%c0, %c0_7], %16 {strides = array<i32>} : memref<8x128xf32, #tpu.memory_space<vmem>>, vector<8x128xf32>,
    } else {
    }
    %c1_i32 = arith.constant 1 : i32
    %3 = arith.muli %arg0, %c1_i32 : i32
    %4 = arith.addi %3, %arg1 : i32
    %c1_i32_1 = arith.constant 1 : i32
    %5 = arith.addi %4, %c1_i32_1 : i32
    %c8_i32 = arith.constant 8 : i32
    %6 = arith.muli %5, %c8_i32 : i32
    %c1_i32_2 = arith.constant 1 : i32
    %7 = arith.cmpi sle, %6, %c1_i32_2 : i32
    %8 = arith.extui %7 : i1 to i32
    %c0_i32_3 = arith.constant 0 : i32
    %9 = arith.cmpi ne, %8, %c0_i32_3 : i32
    scf.if %9 {
      %c0 = arith.constant 0 : index
      %c0_7 = arith.constant 0 : index
      %16 = vector.load %arg4[%c0, %c0_7] : memref<8x128xf32, #tpu.memory_space<vmem>>, vector<8x128xf32>
      %c0_8 = arith.constant 0 : index
      %c0_9 = arith.constant 0 : index
      %17 = vector.load %arg2[%c0_8, %c0_9] : memref<8x128xf32, #tpu.memory_space<vmem>>, vector<8x128xf32>
      %18 = arith.addf %16, %17 : vector<8x128xf32>
      %c0_10 = arith.constant 0 : index
      %c0_11 = arith.constant 0 : index
      %19 = vector.load %arg4[%c0_10, %c0_11] : memref<8x128xf32, #tpu.memory_space<vmem>>, vector<8x128xf32>
      tpu.vector_store %arg4[%c0_10, %c0_11], %18 {strides = array<i32>} : memref<8x128xf32, #tpu.memory_space<vmem>>, vector<8x128xf32>,
    } else {
    }
    %true = arith.constant true
    %10 = arith.xori %7, %true : i1
    %11 = arith.extui %10 : i1 to i32
    %c0_i32_4 = arith.constant 0 : i32
    %12 = arith.cmpi ne, %11, %c0_i32_4 : i32
    scf.if %12 {
      %c1_i32_7 = arith.constant 1 : i32
      %16 = arith.muli %arg0, %c1_i32_7 : i32
      %17 = arith.addi %16, %arg1 : i32
      %c8_i32_8 = arith.constant 8 : i32
      %18 = arith.muli %17, %c8_i32_8 : i32
      %c0 = arith.constant 0 : index
      %c0_9 = arith.constant 0 : index
      %19 = vector.load %arg4[%c0, %c0_9] : memref<8x128xf32, #tpu.memory_space<vmem>>, vector<8x128xf32>
      %c0_10 = arith.constant 0 : index
      %c0_11 = arith.constant 0 : index
      %20 = vector.load %arg2[%c0_10, %c0_11] : memref<8x128xf32, #tpu.memory_space<vmem>>, vector<8x128xf32>
      %21 = tpu.iota {dimensions = array<i32: 0>} : vector<8x1xi32>
      %c0_i32_12 = arith.constant 0 : i32
      %22 = arith.addi %18, %c0_i32_12 : i32
      %23 = vector.broadcast %22 : i32 to vector<8x1xi32>
      %24 = arith.addi %23, %21 : vector<8x1xi32>
      %c1_i32_13 = arith.constant 1 : i32
      %25 = vector.broadcast %c1_i32_13 : i32 to vector<8x1xi32>
      %26 = arith.cmpi slt, %24, %25 : vector<8x1xi32>
      %cst = arith.constant 0.000000e+00 : f32
      %27 = vector.shape_cast %26 : vector<8x1xi1> to vector<8x1xi1>
      %28 = vector.broadcast %27 : vector<8x1xi1> to vector<8x128xi1>
      %29 = vector.broadcast %cst : f32 to vector<8x128xf32>
      %30 = arith.select %28, %20, %29 : vector<8x128xi1>, vector<8x128xf32>
      %31 = arith.addf %19, %30 : vector<8x128xf32>
      %c0_14 = arith.constant 0 : index
      %c0_15 = arith.constant 0 : index
      %32 = vector.load %arg4[%c0_14, %c0_15] : memref<8x128xf32, #tpu.memory_space<vmem>>, vector<8x128xf32>
      tpu.vector_store %arg4[%c0_14, %c0_15], %31 {strides = array<i32>} : memref<8x128xf32, #tpu.memory_space<vmem>>, vector<8x128xf32>,
    } else {
    }
    %c0_i32_5 = arith.constant 0 : i32
    %13 = arith.cmpi eq, %arg1, %c0_i32_5 : i32
    %14 = arith.extui %13 : i1 to i32
    %c0_i32_6 = arith.constant 0 : i32
    %15 = arith.cmpi ne, %14, %c0_i32_6 : i32
    scf.if %15 {
      %c0 = arith.constant 0 : index
      %c0_7 = arith.constant 0 : index
      %16 = vector.load %arg4[%c0, %c0_7] : memref<8x128xf32, #tpu.memory_space<vmem>>, vector<8x128xf32>
      %c0_8 = arith.constant 0 : index
      %c0_9 = arith.constant 0 : index
      %c0_10 = arith.constant 0 : index
      %17 = vector.load %arg3[%c0_8, %c0_9, %c0_10] : memref<1x8x128xf32, #tpu.memory_space<vmem>>, vector<1x8x128xf32>
      %18 = vector.shape_cast %17 : vector<1x8x128xf32> to vector<8x128xf32>
      %19 = vector.shape_cast %16 : vector<8x128xf32> to vector<1x8x128xf32>
      tpu.vector_store %arg3[%c0_8, %c0_9, %c0_10], %19 {strides = array<i32>} : memref<1x8x128xf32, #tpu.memory_space<vmem>>, vector<1x8x128xf32>,
    } else {
    }
    return
  }
  func.func @transform_0(%arg0: i32, %arg1: i32) -> (i32, i32) {
    %c1_i32 = arith.constant 1 : i32
    %0 = arith.muli %arg0, %c1_i32 : i32
    %1 = arith.addi %0, %arg1 : i32
    %c0_i32 = arith.constant 0 : i32
    %c0_i32_0 = arith.constant 0 : i32
    return %1, %c0_i32 : i32, i32
  }
  func.func @transform_1(%arg0: i32, %arg1: i32) -> (i32, i32, i32) {
    %c0_i32 = arith.constant 0 : i32
    %c0_i32_0 = arith.constant 0 : i32
    %c0_i32_1 = arith.constant 0 : i32
    return %arg0, %c0_i32, %c0_i32_0 : i32, i32, i32
  }
}

</mosaic_0001>

<llo_original>
// kernel: tpu_custom_call.1
$region0: #{tpu_custom_call.1}
  #allocation0 [shape = 'u32[]', space=smem, size = 0x4, offset = 0x4, fixed_abs, tag = 'smem constant byte address 0x4 - core index']
  #allocation1 [shape = 'u32[144,128]{1,0:T(1,128)}', space=vmem, size = 0x12000, scoped, tag = 'internal scratch']
  #allocation2 [shape = 'f32[8,128]{1,0:T(8,128)}', space=vmem, size = 0x1000, scoped, tag = 'scratch operand']
  %s0 = inlined_call_operand.hbm [shape: f32[1,128], index: 0, kind: input, shape index: {}]
  %s1 = inlined_call_operand.hbm [shape: f32[1,8,128], index: 1, kind: output, shape index: {}]
  %s2 = sld [smem:[#allocation0]]
  $region34: #{tpu_custom_call.1} parent=0
    _
  %s4 = ssub.s32 1, %s2
  %s5 = scalar_select 0, %s4, %s2
  $region1: #{tpu_custom_call.1} parent=0
    #allocation3 [shape = 'u8[4096]{0}', space=vmem, size = 0x1000, scoped, tag = 'input window, operand 0, single buffered']
    #allocation4 [shape = 's32[1]{0}', space=sflag, size = 0x4, scoped, tag = 'scoped memory for tpu_custom_call.1']
    #allocation5 [shape = 's32[1]{0}', space=sflag, size = 0x4, scoped, tag = 'scoped memory for tpu_custom_call.1']
    #allocation6 [shape = 'u8[4096]{0}', space=vmem, size = 0x1000, scoped, tag = 'output window, operand 0, single buffered']
    %6 = vsyncpa [#allocation4], 0
    %7 = vsyncpa [#allocation5], 0
    // Predicated region
    $region2: #{tpu_custom_call.1} parent=1 // pred_check
      _
    $region3: #{tpu_custom_call.1} parent=1 // pred_check_branch
      %9 = sbr.rel (0) target = $region5
    $region4: #{tpu_custom_call.1} parent=1 // pred_region
      %s10 = sadd.s32 0, 0
      %s11 = smul.u32 8, %s10
      %s12 = ssub.s32 1, %s11
      %s13 = smul.u32 16, %s12
      %s15 = ssub.s32 128, %s13
      %16 = vsyncadd [#allocation4], %s15
      %p17 = scmp.ne.s32.totalorder 0, %s13
      %s18 = smul.addr %s11, 16
      %s19 = scalar_lea.hbm %s0, %s18
      %s20 = sshll.u32 [#allocation3], 4
      %s21 = int_to_ptr.vmem [resolvable:$true] %s20
      %s22 = sshll.u32 %s12, 4
      %26 = dma.hbm_to_vmem [thread:$0]  (%p17), %s19, %s22, %s21, [#allocation4], 16, 16, 1
    $region5: #{tpu_custom_call.1} parent=1 // pred_fallthru
      _
    // Predicated region
    $region6: #{tpu_custom_call.1} parent=1 // pred_check
      _
    $region7: #{tpu_custom_call.1} parent=1 // pred_check_branch
      %28 = sbr.rel (0) target = $region9
    $region8: #{tpu_custom_call.1} parent=1 // pred_region
      %29 = dma.done [#allocation4], 128
    $region9: #{tpu_custom_call.1} parent=1 // pred_fallthru
      _
    %s30 = sadd.s32 0, 0
    %s31 = smul.u32 8, %s30
    %s32 = ssub.s32 1, %s31
    %s33 = smul.u32 16, %s32
    %p34 = scmp.eq.s32.totalorder 0, 0
    // Predicated region
    $region10: #{tpu_custom_call.1} parent=1 // pred_check
      %p35 = pneg %p34
    $region11: #{tpu_custom_call.1} parent=1 // pred_check_branch
      %37 = sbr.rel (%p35) target = $region13
    $region12: #{tpu_custom_call.1} parent=1 // pred_region
      %38 = vst [vmem:[#allocation2] sm:$0xff] 0.0
    $region13: #{tpu_custom_call.1} parent=1 // pred_fallthru
      _
    %s39 = sadd.s32 0, 0
    %s40 = sadd.s32 %s39, 1
    %s41 = smul.u32 %s40, 8
    %p42 = scmp.le.s32.totalorder %s41, 1
    // Predicated region
    $region14: #{tpu_custom_call.1} parent=1 // pred_check
      %p43 = pneg %p42
    $region15: #{tpu_custom_call.1} parent=1 // pred_check_branch
      %45 = sbr.rel (%p43) target = $region17
    $region16: #{tpu_custom_call.1} parent=1 // pred_region
      %v46 = vld [vmem:[#allocation2] sm:$0xff]
      %v47 = vld [vmem:[#allocation3] sm:$0xff]
      %v48 = vadd.f32 %v46, %v47
      %49 = vst [vmem:[#allocation2] sm:$0xff] %v48
    $region17: #{tpu_custom_call.1} parent=1 // pred_fallthru
      _
    %p50 = scmp.gt.s32.totalorder %s41, 1
    // Predicated region
    $region18: #{tpu_custom_call.1} parent=1 // pred_check
      %p51 = pneg %p50
    $region19: #{tpu_custom_call.1} parent=1 // pred_check_branch
      %53 = sbr.rel (%p51) target = $region21
    $region20: #{tpu_custom_call.1} parent=1 // pred_region
      %s54 = smul.u32 %s39, 8
      %v55 = vld [vmem:[#allocation2] sm:$0xff]
      %v56 = vld [vmem:[#allocation3] sm:$0xff]
      %v57 = vlaneseq
      %v58 = vshrl.u32 %v57, 7
      %v59 = vstv %s54
      %v60 = vadd.s32 %v59, %v58
      %vm61 = vcmp.lt.s32.totalorder %v60, 1
      %v62 = vsel %vm61, 1, 0
      %vm63 = vcmp.eq.s32.totalorder %v62, 1
      %v64 = vsel %vm63, %v56, 0.0
      %v65 = vadd.f32 %v55, %v64
      %66 = vst [vmem:[#allocation2] sm:$0xff] %v65
    $region21: #{tpu_custom_call.1} parent=1 // pred_fallthru
      _
    // Predicated region
    $region22: #{tpu_custom_call.1} parent=1 // pred_check
      %p67 = pneg %p34
    $region23: #{tpu_custom_call.1} parent=1 // pred_check_branch
      %69 = sbr.rel (%p67) target = $region25
    $region24: #{tpu_custom_call.1} parent=1 // pred_region
      %v70 = vld [vmem:[#allocation2] sm:$0xff]
      %71 = vst [vmem:[#allocation6] sm:$0xff] %v70
    $region25: #{tpu_custom_call.1} parent=1 // pred_fallthru
      _
    // Predicated region
    $region26: #{tpu_custom_call.1} parent=1 // pred_check
      _
    $region27: #{tpu_custom_call.1} parent=1 // pred_check_branch
      %73 = sbr.rel (0) target = $region29
    $region28: #{tpu_custom_call.1} parent=1 // pred_region
      %s75 = ssub.s32 128, 128
      %76 = vsyncadd [#allocation5], %s75
      %s78 = sshll.u32 [#allocation6], 4
      %s79 = int_to_ptr.vmem [resolvable:$true] %s78
      %81 = dma.vmem_to_hbm [thread:$0]  %s79, 128, %s1, [#allocation5]
    $region29: #{tpu_custom_call.1} parent=1 // pred_fallthru
      _
    // Predicated region
    $region30: #{tpu_custom_call.1} parent=1 // pred_check
      _
    $region31: #{tpu_custom_call.1} parent=1 // pred_check_branch
      %83 = sbr.rel (0) target = $region33
    $region32: #{tpu_custom_call.1} parent=1 // pred_region
      %84 = dma.done [#allocation5], 128
    $region33: #{tpu_custom_call.1} parent=1 // pred_fallthru
      _
    %85 = vsyncpa [#allocation4], 1
    %86 = vsyncpa [#allocation5], 1

</llo_original>
